<compile_context>
chip_gen: v7x
topology: tpu7x:2x2x1
jax: 0.10.0
libtpu: 0.0.40
codegen_flags: <defaults>
</compile_context>

<pallas_src>
import jax
import jax.numpy as jnp
from jax import lax
from jax.experimental import pallas as pl
from jax.experimental.pallas import tpu as pltpu


def _round_up(x, m):
    return (x + m - 1) // m * m


def _landmark_head_kernel(x_ref, w_ref, b_ref, o_ref):
    """One grid step: nb images x one HW tile.

    x_ref: (nb, C, T)   native-NCHW slab (free view of contiguous NCHW)
    w_ref: (C, O)       full conv1x1 weight, resident in VMEM
    b_ref: (1, O)       bias, f32, resident in VMEM
    o_ref: (nb, T, O)   output tile in NHWC-flat order
    """
    nb = x_ref.shape[0]
    for i in range(nb):  # nb is a small static block dim -> unrolled
        acc = lax.dot_general(
            x_ref[i], w_ref[...],
            dimension_numbers=(((0,), (0,)), ((), ())),  # contract over C
            preferred_element_type=jnp.float32,
        )  # (T, O) f32
        o_ref[i] = (acc + b_ref[...]).astype(o_ref.dtype)


def landmark_head(x_nchw, weight, bias, num_anchors=3, *,
                  tile_hw=8192, per_step_budget_bytes=8 * 1024 * 1024,
                  out_dtype=None):
    """LandmarkHead forward: conv1x1 -> permute(0,2,3,1) -> view(N, -1, 10).

    x_nchw: (N, C, H, W) activation in native torch layout (f32 or bf16)
    weight: (O, C) or (O, C, 1, 1) torch Conv2d weight, O = num_anchors * 10
    bias:   (O,)
    Note: weight is cast to x.dtype (bf16 inputs -> bf16 weights); accumulation
    stays f32 regardless.
    """
    N, C, H, W = x_nchw.shape
    O = int(weight.shape[0])
    assert O == num_anchors * 10
    assert tile_hw % 128 == 0

    HW = H * W
    # Free view of contiguous NCHW: (N, C, H*W).  No transpose materialized.
    x = x_nchw.reshape(N, C, HW)
    out_dtype = out_dtype or x.dtype
    x_bytes = x.dtype.itemsize
    o_bytes = jnp.dtype(out_dtype).itemsize

    w_mat = weight.reshape(O, C).T.astype(x.dtype)   # (C, O)
    b_mat = bias.reshape(1, O).astype(jnp.float32)   # (1, O)

    # ---- choose HW tile t (lane dim) ----------------------------------------
    O_phys = _round_up(O, 128)                       # physical lane pad of out block
    per_pos_bytes = C * x_bytes + O_phys * o_bytes   # VMEM cost per HW position
    t_budget = max(128, (per_step_budget_bytes // per_pos_bytes) // 128 * 128)
    if HW <= min(tile_hw, t_budget):
        t = HW                                       # single full-extent tile
    else:
        t = min(tile_hw, t_budget)                   # 128-multiple; ragged last block masked

    # ---- images per step (amortize per-step overhead on small feature maps) --
    per_img_bytes = t * per_pos_bytes
    nb = int(min(N, max(1, per_step_budget_bytes // per_img_bytes), 8))

    # ---- guarantee >= 2 grid steps so both v7x TensorCores get work ----------
    if pl.cdiv(N, nb) * pl.cdiv(HW, t) < 2:
        if N > 1:
            nb = pl.cdiv(N, 2)
        elif HW >= 256:
            t = _round_up(pl.cdiv(HW, 2), 128)       # split HW into 2 aligned tiles

    grid = (pl.cdiv(N, nb), pl.cdiv(HW, t))

    # ---- explicit VMEM accounting (double-buffered, lane/sublane padded) ------
    x_blk = nb * _round_up(C, 16) * _round_up(t, 128) * x_bytes
    o_blk = nb * _round_up(t, 8) * O_phys * o_bytes
    w_blk = _round_up(C, 16) * O_phys * x_bytes
    b_blk = 8 * 128 * 4
    vmem_bytes = 2 * (x_blk + o_blk + w_blk + b_blk)
    vmem_limit = int(min(64 << 20, max(32 << 20, 2 * vmem_bytes + (2 << 20))))

    cost = pl.CostEstimate(
        flops=2 * N * HW * C * O,
        transcendentals=0,
        bytes_accessed=(N * C * HW * x_bytes + C * O * x_bytes + O * 4
                        + N * HW * O * o_bytes),
    )

    out = pl.pallas_call(
        _landmark_head_kernel,
        out_shape=jax.ShapeDtypeStruct((N, HW, O), out_dtype),
        grid_spec=pltpu.PrefetchScalarGridSpec(
            num_scalar_prefetch=0,
            grid=grid,
            in_specs=[
                pl.BlockSpec((nb, C, t), lambda i, j: (i, 0, j)),  # X slab
                pl.BlockSpec((C, O), lambda i, j: (0, 0)),         # weight, resident
                pl.BlockSpec((1, O), lambda i, j: (0, 0)),         # bias, resident
            ],
            out_specs=pl.BlockSpec((nb, t, O), lambda i, j: (i, j, 0)),
        ),
        compiler_params=pltpu.CompilerParams(
            dimension_semantics=("parallel", "parallel"),
            vmem_limit_bytes=vmem_limit,
        ),
        cost_estimate=cost,
    )(x, w_mat, b_mat)

    # (N, HW, num_anchors*10) -> (N, HW*num_anchors, 10): contiguous, free view.
    return out.reshape(N, HW * num_anchors, 10)


if __name__ == "__main__":
    key = jax.random.PRNGKey(0)
    k_x, k_w, k_b = jax.random.split(key, 3)

    # Small shapes consistent with the module: batch=2, inchannels=32,
    # spatial=16x16, num_anchors=3 -> out channels = 30.
    N, C, H, W = 2, 32, 16, 16
    num_anchors = 3
    O = num_anchors * 10

    x = jax.random.normal(k_x, (N, C, H, W), dtype=jnp.float32)
    weight = jax.random.normal(k_w, (O, C), dtype=jnp.float32) * 0.05
    bias = jax.random.normal(k_b, (O,), dtype=jnp.float32) * 0.05

    out = landmark_head(x, weight, bias, num_anchors=num_anchors)
    out = jax.block_until_ready(out)

    # Plain-JAX reference of the same math (conv1x1 + permute + view).
    ref = jnp.einsum("nchw,oc->nhwo", x, weight) + bias
    ref = ref.reshape(N, H * W * num_anchors, 10)

    assert out.shape == (N, H * W * num_anchors, 10)
    assert jnp.allclose(out, ref, atol=1e-4, rtol=1e-4)

    print("KERNEL_OK")
</pallas_src>

<mosaic_0001>
module attributes {stable_mosaic.version = 11 : i64} {
  func.func @_landmark_head_kernel(%arg0: i32, %arg1: i32, %arg2: memref<1x32x256xf32, #tpu.memory_space<vmem>>, %arg3: memref<32x30xf32, #tpu.memory_space<vmem>>, %arg4: memref<1x30xf32, #tpu.memory_space<vmem>>, %arg5: memref<1x256x30xf32, #tpu.memory_space<vmem>>) attributes {dimension_semantics = [#tpu.dimension_semantics<parallel>, #tpu.dimension_semantics<parallel>], iteration_bounds = array<i64: 2, 1>, scalar_prefetch = 0 : i64, scratch_operands = 0 : i64, tpu.core_type = #tpu.core_type<tc>, window_params = [{transform_indices = @transform_0, window_bounds = array<i64: 1, 32, 256>}, {pipeline_mode = #tpu.pipeline_mode<synchronous>, transform_indices = @transform_1, window_bounds = array<i64: 32, 30>}, {pipeline_mode = #tpu.pipeline_mode<synchronous>, transform_indices = @transform_2, window_bounds = array<i64: 1, 30>}, {transform_indices = @transform_3, window_bounds = array<i64: 1, 256, 30>}]} {
    %c0 = arith.constant 0 : index
    %c0_0 = arith.constant 0 : index
    %c0_1 = arith.constant 0 : index
    %0 = vector.load %arg2[%c0, %c0_0, %c0_1] : memref<1x32x256xf32, #tpu.memory_space<vmem>>, vector<1x32x256xf32>
    %1 = vector.shape_cast %0 : vector<1x32x256xf32> to vector<32x256xf32>
    %c0_2 = arith.constant 0 : index
    %c0_3 = arith.constant 0 : index
    %2 = vector.load %arg3[%c0_2, %c0_3] : memref<32x30xf32, #tpu.memory_space<vmem>>, vector<32x30xf32>
    %cst = arith.constant dense<0.000000e+00> : vector<256x30xf32>
    %3 = tpu.matmul %1, %2, %cst {dimension_numbers = #tpu.dot_dimension_numbers<[0], [0], [1], [1], [0, 1, 1, 1], [], []>} : vector<32x256xf32>, vector<32x30xf32>, vector<256x30xf32> -> vector<256x30xf32>
    %c0_4 = arith.constant 0 : index
    %c0_5 = arith.constant 0 : index
    %4 = vector.load %arg4[%c0_4, %c0_5] : memref<1x30xf32, #tpu.memory_space<vmem>>, vector<1x30xf32>
    %5 = vector.broadcast %4 : vector<1x30xf32> to vector<256x30xf32>
    %6 = arith.addf %3, %5 : vector<256x30xf32>
    %c0_6 = arith.constant 0 : index
    %c0_7 = arith.constant 0 : index
    %c0_8 = arith.constant 0 : index
    %7 = vector.load %arg5[%c0_6, %c0_7, %c0_8] : memref<1x256x30xf32, #tpu.memory_space<vmem>>, vector<1x256x30xf32>
    %8 = vector.shape_cast %7 : vector<1x256x30xf32> to vector<256x30xf32>
    %9 = vector.shape_cast %6 : vector<256x30xf32> to vector<1x256x30xf32>
    tpu.vector_store %arg5[%c0_6, %c0_7, %c0_8], %9 {strides = array<i32>} : memref<1x256x30xf32, #tpu.memory_space<vmem>>, vector<1x256x30xf32>,
    return
  }
  func.func @transform_0(%arg0: i32, %arg1: i32) -> (i32, i32, i32) {
    %c0_i32 = arith.constant 0 : i32
    %c0_i32_0 = arith.constant 0 : i32
    return %arg0, %c0_i32, %arg1 : i32, i32, i32
  }
  func.func @transform_1(%arg0: i32, %arg1: i32) -> (i32, i32) {
    %c0_i32 = arith.constant 0 : i32
    %c0_i32_0 = arith.constant 0 : i32
    %c0_i32_1 = arith.constant 0 : i32
    return %c0_i32, %c0_i32_0 : i32, i32
  }
  func.func @transform_2(%arg0: i32, %arg1: i32) -> (i32, i32) {
    %c0_i32 = arith.constant 0 : i32
    %c0_i32_0 = arith.constant 0 : i32
    %c0_i32_1 = arith.constant 0 : i32
    return %c0_i32, %c0_i32_0 : i32, i32
  }
  func.func @transform_3(%arg0: i32, %arg1: i32) -> (i32, i32, i32) {
    %c0_i32 = arith.constant 0 : i32
    %c0_i32_0 = arith.constant 0 : i32
    return %arg0, %arg1, %c0_i32 : i32, i32, i32
  }
}

</mosaic_0001>

<llo_original>
// kernel: tpu_custom_call.1
$region0: #{tpu_custom_call.1}
  #allocation0 [shape = 'u32[]', space=smem, size = 0x4, offset = 0x4, fixed_abs, tag = 'smem constant byte address 0x4 - core index']
  #allocation1 [shape = 'u32[144,128]{1,0:T(1,128)}', space=vmem, size = 0x12000, scoped, tag = 'internal scratch']
  %s0 = inlined_call_operand.hbm [shape: f32[2,32,256], index: 0, kind: input, shape index: {}]
  %s1 = inlined_call_operand.hbm [shape: f32[32,30], index: 1, kind: input, shape index: {}]
  %s2 = inlined_call_operand.vmem [shape: f32[1,30], index: 2, kind: input, shape index: {}]
  %s3 = inlined_call_operand.vmem [shape: f32[2,256,30], index: 3, kind: output, shape index: {}]
  %s4 = sld [smem:[#allocation0]]
  $region53: #{tpu_custom_call.1} parent=0
    _
  %s6 = ssub.s32 1, %s4
  %s7 = scalar_select 0, %s6, %s4
  $region1: #{tpu_custom_call.1} parent=0
    #allocation2 [shape = 'u8[65536]{0}', space=vmem, size = 0x10000, scoped, tag = 'input window, operand 0']
    #allocation3 [shape = 's32[2]{0}', space=sflag, size = 0x8, scoped, tag = 'scoped memory for tpu_custom_call.1']
    #allocation4 [shape = 'u8[16384]{0}', space=vmem, size = 0x4000, scoped, tag = 'input window, operand 1, single buffered']
    #allocation5 [shape = 's32[1]{0}', space=sflag, size = 0x4, scoped, tag = 'scoped memory for tpu_custom_call.1']
    %8 = vsyncpa [#allocation3], 0
    %s9 = scalar_lea.sflag [#allocation3], 1
    %10 = vsyncpa %s9, 0
    %11 = vsyncpa [#allocation5], 0
    loop: start=0, step=1, limit=4
    $region2: #{tpu_custom_call.1} parent=1 // loop_pre_header
      _
    $region3: #{tpu_custom_call.1} parent=1 // loop_header
      %s13 = sphi 0, %s17
      %p14 = scmp.ge.s32.totalorder %s13, 4
      %s20 = sphi 0, %s32
      %s21 = sphi 0, %s28
      %s22 = sphi 0, %s20
      %s23 = sphi 0, %s21
      %s24 = sphi 0, %s22
      %s25 = sphi 0, %s23
      %s37 = sphi 0, %s39
      %s40 = sphi 0, %s37
      %s41 = sphi 0, %s40
      %s57 = sphi 0, %s41
      %s61 = sphi 0, %s61
      %s63 = sphi 0, %s61
      %s64 = sphi 0, %s63
      %s78 = sphi 0, %s64
      %s82 = sphi 0, %s82
      %s84 = sphi 0, %s82
      %s85 = sphi 0, %s84
      %s99 = sphi 0, %s85
      %s107 = sphi 0, %s109
      %s110 = sphi 0, %s107
      %s111 = sphi 0, %s110
      %s127 = sphi 0, %s111
    $region4: #{tpu_custom_call.1} parent=1 // loop_header_branch
      %16 = sbr.rel (%p14) target = $region8
    $region5: #{tpu_custom_call.1} parent=1 // loop_body
      %s18 = ssub.s32 %s13, 1
      %s19 = ssub.s32 %s13, 2
      %s26 = sadd.s32 1, %s21
      %p27 = scmp.ge.s32.totalorder %s26, 1
      %s28 = scalar_select %p27, 0, %s26
      %s29 = sadd.s32 1, %s20
      %s30 = scalar_select %p27, %s29, %s20
      %p31 = scmp.ge.s32.totalorder %s30, 2
      %s32 = scalar_select %p31, 0, %s30
      %s33 = ssub.s32 %s20, %s32
      %s34 = ssub.s32 %s21, %s28
      %s35 = sor.u32 %s33, %s34
      %p36 = scmp.eq.s32.totalorder %s35, 0
      %s38 = sadd.s32 %s37, 1
      %s39 = scalar_select %p36, %s37, %s38
      %p42 = pneg %p36
      %p43 = scmp.eq.s32.totalorder %s13, 1
      %p44 = por %p42, %p43
      %p45 = scmp.ne.s32.totalorder %s37, %s40
      %p46 = scmp.eq.s32.totalorder %s13, 0
      %p47 = por %p45, %p46
      %p48 = scmp.ne.s32.totalorder %s37, %s40
      %p49 = scmp.eq.s32.totalorder %s18, 1
      %p50 = por %p48, %p49
      %p51 = scmp.ne.s32.totalorder %s40, %s41
      %p52 = scmp.eq.s32.totalorder %s18, 0
      %p53 = por %p51, %p52
      %p54 = scmp.ne.s32.totalorder %s40, %s41
      %p55 = scmp.eq.s32.totalorder %s19, 1
      %p56 = por %p54, %p55
      %p58 = scmp.ne.s32.totalorder %s41, %s57
      %p59 = scmp.eq.s32.totalorder %s19, 0
      %p60 = por %p58, %p59
      %s62 = sadd.s32 %s61, 1
      %p65 = scmp.eq.s32.totalorder %s13, 1
      %p66 = scmp.ne.s32.totalorder %s61, %s63
      %p67 = scmp.eq.s32.totalorder %s13, 0
      %p68 = por %p66, %p67
      %p69 = scmp.ne.s32.totalorder %s61, %s63
      %p70 = scmp.eq.s32.totalorder %s18, 1
      %p71 = por %p69, %p70
      %p72 = scmp.ne.s32.totalorder %s63, %s64
      %p73 = scmp.eq.s32.totalorder %s18, 0
      %p74 = por %p72, %p73
      %p75 = scmp.ne.s32.totalorder %s63, %s64
      %p76 = scmp.eq.s32.totalorder %s19, 1
      %p77 = por %p75, %p76
      %p79 = scmp.ne.s32.totalorder %s64, %s78
      %p80 = scmp.eq.s32.totalorder %s19, 0
      %p81 = por %p79, %p80
      %s83 = sadd.s32 %s82, 1
      %p86 = scmp.eq.s32.totalorder %s13, 1
      %p87 = scmp.ne.s32.totalorder %s82, %s84
      %p88 = scmp.eq.s32.totalorder %s13, 0
      %p89 = por %p87, %p88
      %p90 = scmp.ne.s32.totalorder %s82, %s84
      %p91 = scmp.eq.s32.totalorder %s18, 1
      %p92 = por %p90, %p91
      %p93 = scmp.ne.s32.totalorder %s84, %s85
      %p94 = scmp.eq.s32.totalorder %s18, 0
      %p95 = por %p93, %p94
      %p96 = scmp.ne.s32.totalorder %s84, %s85
      %p97 = scmp.eq.s32.totalorder %s19, 1
      %p98 = por %p96, %p97
      %p100 = scmp.ne.s32.totalorder %s85, %s99
      %p101 = scmp.eq.s32.totalorder %s19, 0
      %p102 = por %p100, %p101
      %s103 = ssub.s32 %s20, %s32
      %s104 = ssub.s32 %s21, %s28
      %s105 = sor.u32 %s103, %s104
      %p106 = scmp.eq.s32.totalorder %s105, 0
      %s108 = sadd.s32 %s107, 1
      %s109 = scalar_select %p106, %s107, %s108
      %p112 = pneg %p106
      %p113 = scmp.eq.s32.totalorder %s13, 1
      %p114 = por %p112, %p113
      %p115 = scmp.ne.s32.totalorder %s107, %s110
      %p116 = scmp.eq.s32.totalorder %s13, 0
      %p117 = por %p115, %p116
      %p118 = scmp.ne.s32.totalorder %s107, %s110
      %p119 = scmp.eq.s32.totalorder %s18, 1
      %p120 = por %p118, %p119
      %p121 = scmp.ne.s32.totalorder %s110, %s111
      %p122 = scmp.eq.s32.totalorder %s18, 0
      %p123 = por %p121, %p122
      %p124 = scmp.ne.s32.totalorder %s110, %s111
      %p125 = scmp.eq.s32.totalorder %s19, 1
      %p126 = por %p124, %p125
      %p128 = scmp.ne.s32.totalorder %s111, %s127
      %p129 = scmp.eq.s32.totalorder %s19, 0
      %p130 = por %p128, %p129
      %p131 = scmp.le.s32.totalorder 1, %s13
      %p132 = scmp.lt.s32.totalorder %s13, 3
      %p133 = pnand %p131, %p132
      %p134 = pneg %p133
      // Predicated region
      $region9: #{tpu_custom_call.1} parent=5 // pred_check
        _
      $region10: #{tpu_custom_call.1} parent=5 // pred_check_branch
        %136 = sbr.rel (%p133) target = $region12
      $region11: #{tpu_custom_call.1} parent=5 // pred_region
        %s137 = ssub.s32 %s13, 1
        // Predicated region
        $region13: #{tpu_custom_call.1} parent=11 // pred_check
          %p138 = pneg %p74
        $region14: #{tpu_custom_call.1} parent=11 // pred_check_branch
          %140 = sbr.rel (%p138) target = $region16
        $region15: #{tpu_custom_call.1} parent=11 // pred_region
          %s142 = ssub.s32 512, 512
          %143 = vsyncadd [#allocation5], %s142
          %s144 = sshll.u32 [#allocation4], 4
          %s145 = int_to_ptr.vmem [resolvable:$true] %s144
          %150 = dma.hbm_to_vmem [thread:$0]  %s1, 512, %s145, [#allocation5], 128, 128, 8
        $region16: #{tpu_custom_call.1} parent=11 // pred_fallthru
          _
        // Predicated region
        $region17: #{tpu_custom_call.1} parent=11 // pred_check
          %p151 = pneg %p95
        $region18: #{tpu_custom_call.1} parent=11 // pred_check_branch
          %153 = sbr.rel (%p151) target = $region20
        $region19: #{tpu_custom_call.1} parent=11 // pred_region
          _
        $region20: #{tpu_custom_call.1} parent=11 // pred_fallthru
          _
      $region12: #{tpu_custom_call.1} parent=5 // pred_fallthru
        _
      %p154 = scmp.lt.s32.totalorder %s13, 2
      // Predicated region
      $region21: #{tpu_custom_call.1} parent=5 // pred_check
        %p155 = pneg %p154
      $region22: #{tpu_custom_call.1} parent=5 // pred_check_branch
        %157 = sbr.rel (%p155) target = $region24
      $region23: #{tpu_custom_call.1} parent=5 // pred_region
        // Predicated region
        $region25: #{tpu_custom_call.1} parent=23 // pred_check
          %p158 = pneg %p47
        $region26: #{tpu_custom_call.1} parent=23 // pred_check_branch
          %160 = sbr.rel (%p158) target = $region28
        $region27: #{tpu_custom_call.1} parent=23 // pred_region
          %s161 = sand.u32 %s37, 1
          %s162 = scalar_lea.sflag [#allocation3], %s161
          %s163 = sand.u32 %s37, 1
          %s164 = smul.addr %s163, 64
          %s165 = scalar_lea.vmem [#allocation2], %s164
          %s166 = smul.u32 2, %s21
          %s168 = ssub.s32 1024, 1024
          %169 = vsyncadd %s162, %s168
          %s170 = smul.addr %s20, 8
          %s171 = sadd.s32 %s166, %s170
          %s172 = smul.addr %s171, 128
          %s173 = scalar_lea.hbm %s0, %s172
          %s174 = sshll.u32 %s165, 4
          %s175 = int_to_ptr.vmem [resolvable:$true] %s174
          %180 = dma.hbm_to_vmem [thread:$0]  %s173, 1024, %s175, %s162, 256, 256, 16
        $region28: #{tpu_custom_call.1} parent=23 // pred_fallthru
          _
      $region24: #{tpu_custom_call.1} parent=5 // pred_fallthru
        _
      %p181 = scmp.le.s32.totalorder 1, %s13
      %p182 = scmp.lt.s32.totalorder %s13, 3
      %p183 = pnand %p181, %p182
      %p184 = pneg %p183
      // Predicated region
      $region29: #{tpu_custom_call.1} parent=5 // pred_check
        _
      $region30: #{tpu_custom_call.1} parent=5 // pred_check_branch
        %186 = sbr.rel (%p183) target = $region32
      $region31: #{tpu_custom_call.1} parent=5 // pred_region
        %s187 = ssub.s32 %s13, 1
        %s188 = sand.u32 %s40, 1
        %s189 = scalar_lea.sflag [#allocation3], %s188
        %s190 = sand.u32 %s40, 1
        %s191 = smul.addr %s190, 64
        %s192 = scalar_lea.vmem [#allocation2], %s191
        // Predicated region
        $region33: #{tpu_custom_call.1} parent=31 // pred_check
          %p193 = pneg %p53
        $region34: #{tpu_custom_call.1} parent=31 // pred_check_branch
          %195 = sbr.rel (%p193) target = $region36
        $region35: #{tpu_custom_call.1} parent=31 // pred_region
          %196 = dma.done %s189, 1024
        $region36: #{tpu_custom_call.1} parent=31 // pred_fallthru
          _
        // Predicated region
        $region37: #{tpu_custom_call.1} parent=31 // pred_check
          %p197 = pneg %p74
        $region38: #{tpu_custom_call.1} parent=31 // pred_check_branch
          %199 = sbr.rel (%p197) target = $region40
        $region39: #{tpu_custom_call.1} parent=31 // pred_region
          %200 = dma.done [#allocation5], 512
        $region40: #{tpu_custom_call.1} parent=31 // pred_fallthru
          _
        %s201 = sand.u32 %s40, 1
        %s202 = scalar_lea.sflag [#allocation3], %s201
        %s203 = sand.u32 %s40, 1
        %s204 = smul.addr %s203, 64
        %s205 = scalar_lea.vmem [#allocation2], %s204
        %p206 = pneg %p53
        %p207 = pneg %p50
        %p208 = pneg %p74
        %p209 = pneg %p71
        %p210 = pneg %p95
        %p211 = pneg %p92
        %p212 = pneg %p123
        %p213 = pneg %p120
        %s214 = smul.u32 32, %s23
        %p215 = scmp.lt.s32.totalorder %s22, 1
        %s216 = scalar_select %p215, %s22, 1
        %p217 = scmp.lt.s32.totalorder %s214, 31
        %s218 = scalar_select %p217, %s214, 31
        %s219 = smul.addr %s216, 32
        %s220 = sadd.s32 %s218, %s219
        %s221 = smul.addr %s220, 8
        %s222 = scalar_lea.vmem %s3, %s221
        %s223 = smul.u32 2, %s23
        %s224 = smul.u32 32, %s23
        %p225 = scmp.lt.s32.totalorder %s22, 1
        %s226 = scalar_select %p225, %s22, 1
        %p227 = scmp.lt.s32.totalorder %s224, 31
        %s228 = scalar_select %p227, %s224, 31
        %s229 = smul.addr %s226, 32
        %s230 = sadd.s32 %s228, %s229
        %s231 = smul.addr %s230, 8
        %s232 = scalar_lea.vmem %s3, %s231
        %s233 = smul.u32 32, %s23
        %v234 = vld [vmem:[%s192] sm:$0xff]
        %v235 = vld [vmem:[%s192 + $0x8] sm:$0xff]
        %v236 = vld [vmem:[%s192 + $0x10] sm:$0xff]
        %v237 = vld [vmem:[%s192 + $0x18] sm:$0xff]
        %v238 = vld [vmem:[%s192 + $0x20] sm:$0xff]
        %v239 = vld [vmem:[%s192 + $0x28] sm:$0xff]
        %v240 = vld [vmem:[%s192 + $0x30] sm:$0xff]
        %v241 = vld [vmem:[%s192 + $0x38] sm:$0xff]
        %v242 = vld [vmem:[#allocation4] sm:$0xff]
        %v243 = vld [vmem:[#allocation4 + $0x8] sm:$0xff]
        %v244 = vld [vmem:[#allocation4 + $0x10] sm:$0xff]
        %v245 = vld [vmem:[#allocation4 + $0x18] sm:$0xff]
        %v246 = vld [vmem:[%s2] sm:$0x1]
        %v248 = vlaneseq
        %v249 = vshrl.u32 %v248, 7
        %v250 = vsub.s32 0, %v249
        %v251 = vrot.slane %v246, %v250
        %253 = vxpose.xlu0.b32.start [1/16] %v234, 128
        %254 = vxpose.xlu0.b32.cont [2/16] %v236, 128
        %255 = vxpose.xlu0.b32.cont [3/16] %v238, 128
        %256 = vxpose.xlu0.b32.cont [4/16] %v240, 128
        %257 = vxpose.xlu0.b32.cont [5/16] 0.0, 128
        %258 = vxpose.xlu0.b32.cont [6/16] 0.0, 128
        %259 = vxpose.xlu0.b32.cont [7/16] 0.0, 128
        %260 = vxpose.xlu0.b32.cont [8/16] 0.0, 128
        %261 = vxpose.xlu0.b32.cont [9/16] 0.0, 128
        %262 = vxpose.xlu0.b32.cont [10/16] 0.0, 128
        %263 = vxpose.xlu0.b32.cont [11/16] 0.0, 128
        %264 = vxpose.xlu0.b32.cont [12/16] 0.0, 128
        %265 = vxpose.xlu0.b32.cont [13/16] 0.0, 128
        %266 = vxpose.xlu0.b32.cont [14/16] 0.0, 128
        %267 = vxpose.xlu0.b32.cont [15/16] 0.0, 128
        %268 = vxpose.xlu0.b32.end [16/16] 0.0, 128
        %v269 = vpop.trf.xlu0
        %v270 = vpop.trf.xlu0
        %v271 = vpop.trf.xlu0
        %v272 = vpop.trf.xlu0
        %v273 = vpop.trf.xlu0
        %v274 = vpop.trf.xlu0
        %v275 = vpop.trf.xlu0
        %v276 = vpop.trf.xlu0
        %v277 = vpop.trf.xlu0
        %v278 = vpop.trf.xlu0
        %v279 = vpop.trf.xlu0
        %v280 = vpop.trf.xlu0
        %v281 = vpop.trf.xlu0
        %v282 = vpop.trf.xlu0
        %v283 = vpop.trf.xlu0
        %v284 = vpop.trf.xlu0
        %285 = vxpose.xlu0.b32.start [1/16] %v235, 128
        %286 = vxpose.xlu0.b32.cont [2/16] %v237, 128
        %287 = vxpose.xlu0.b32.cont [3/16] %v239, 128
        %288 = vxpose.xlu0.b32.cont [4/16] %v241, 128
        %289 = vxpose.xlu0.b32.cont [5/16] 0.0, 128
        %290 = vxpose.xlu0.b32.cont [6/16] 0.0, 128
        %291 = vxpose.xlu0.b32.cont [7/16] 0.0, 128
        %292 = vxpose.xlu0.b32.cont [8/16] 0.0, 128
        %293 = vxpose.xlu0.b32.cont [9/16] 0.0, 128
        %294 = vxpose.xlu0.b32.cont [10/16] 0.0, 128
        %295 = vxpose.xlu0.b32.cont [11/16] 0.0, 128
        %296 = vxpose.xlu0.b32.cont [12/16] 0.0, 128
        %297 = vxpose.xlu0.b32.cont [13/16] 0.0, 128
        %298 = vxpose.xlu0.b32.cont [14/16] 0.0, 128
        %299 = vxpose.xlu0.b32.cont [15/16] 0.0, 128
        %300 = vxpose.xlu0.b32.end [16/16] 0.0, 128
        %v301 = vpop.trf.xlu0
        %v302 = vpop.trf.xlu0
        %v303 = vpop.trf.xlu0
        %v304 = vpop.trf.xlu0
        %v305 = vpop.trf.xlu0
        %v306 = vpop.trf.xlu0
        %v307 = vpop.trf.xlu0
        %v308 = vpop.trf.xlu0
        %v309 = vpop.trf.xlu0
        %v310 = vpop.trf.xlu0
        %v311 = vpop.trf.xlu0
        %v312 = vpop.trf.xlu0
        %v313 = vpop.trf.xlu0
        %v314 = vpop.trf.xlu0
        %v315 = vpop.trf.xlu0
        %v316 = vpop.trf.xlu0
        %vm317 = vcmask 261120
        %v319 = vsel %vm317, %v269, 0
        %v322 = vsel %vm317, %v270, 0
        %v325 = vsel %vm317, %v271, 0
        %v328 = vsel %vm317, %v272, 0
        %v331 = vsel %vm317, %v273, 0
        %v334 = vsel %vm317, %v274, 0
        %v337 = vsel %vm317, %v275, 0
        %v340 = vsel %vm317, %v276, 0
        %v343 = vsel %vm317, %v277, 0
        %v346 = vsel %vm317, %v278, 0
        %v349 = vsel %vm317, %v279, 0
        %v352 = vsel %vm317, %v280, 0
        %v355 = vsel %vm317, %v281, 0
        %v358 = vsel %vm317, %v282, 0
        %v361 = vsel %vm317, %v283, 0
        %v364 = vsel %vm317, %v284, 0
        %v367 = vsel %vm317, %v301, 0
        %v370 = vsel %vm317, %v302, 0
        %v373 = vsel %vm317, %v303, 0
        %v376 = vsel %vm317, %v304, 0
        %v379 = vsel %vm317, %v305, 0
        %v382 = vsel %vm317, %v306, 0
        %v385 = vsel %vm317, %v307, 0
        %v388 = vsel %vm317, %v308, 0
        %v391 = vsel %vm317, %v309, 0
        %v394 = vsel %vm317, %v310, 0
        %v397 = vsel %vm317, %v311, 0
        %v400 = vsel %vm317, %v312, 0
        %v403 = vsel %vm317, %v313, 0
        %v406 = vsel %vm317, %v314, 0
        %v409 = vsel %vm317, %v315, 0
        %v412 = vsel %vm317, %v316, 0
        %414 = vmatprep.subr.mxu0 0.0
        %415 = vmatpush1.msra.mxu0 %v242
        %416 = vmatprep.subr.mxu0 0.0
        %417 = vmatpush1.msra.mxu0 %v243
        %418 = vmatprep.subr.mxu0 0.0
        %419 = vmatpush1.msra.mxu0 %v244
        %420 = vmatprep.subr.mxu0 0.0
        %421 = vmatpush1.msra.mxu0 %v245
        %422 = vmatprep.subr.mxu0 0.0
        %423 = vmatpush1.msra.mxu0 0.0
        %424 = vmatprep.subr.mxu0 0.0
        %425 = vmatpush1.msra.mxu0 0.0
        %426 = vmatprep.subr.mxu0 0.0
        %427 = vmatpush1.msra.mxu0 0.0
        %428 = vmatprep.subr.mxu0 0.0
        %429 = vmatpush1.msra.mxu0 0.0
        %430 = vmatprep.subr.mxu0 0.0
        %431 = vmatpush1.msra.mxu0 0.0
        %432 = vmatprep.subr.mxu0 0.0
        %433 = vmatpush1.msra.mxu0 0.0
        %434 = vmatprep.subr.mxu0 0.0
        %435 = vmatpush1.msra.mxu0 0.0
        %436 = vmatprep.subr.mxu0 0.0
        %437 = vmatpush1.msra.mxu0 0.0
        %438 = vmatprep.subr.mxu0 0.0
        %439 = vmatpush1.msra.mxu0 0.0
        %440 = vmatprep.subr.mxu0 0.0
        %441 = vmatpush1.msra.mxu0 0.0
        %442 = vmatprep.subr.mxu0 0.0
        %443 = vmatpush1.msra.mxu0 0.0
        %444 = vmatprep.subr.mxu0 0.0
        %445 = vmatpush1.msra.mxu0 0.0
        %446 = vmatprep.subr.mxu0 0.0
        %447 = vmatpush1.msra.mxu0 0.0
        %448 = vmatprep.subr.mxu0 0.0
        %449 = vmatpush1.msra.mxu0 0.0
        %450 = vmatprep.subr.mxu0 0.0
        %451 = vmatpush1.msra.mxu0 0.0
        %452 = vmatprep.subr.mxu0 0.0
        %453 = vmatpush1.msra.mxu0 0.0
        %454 = vmatprep.subr.mxu0 0.0
        %455 = vmatpush1.msra.mxu0 0.0
        %456 = vmatprep.subr.mxu0 0.0
        %457 = vmatpush1.msra.mxu0 0.0
        %458 = vmatprep.subr.mxu0 0.0
        %459 = vmatpush1.msra.mxu0 0.0
        %460 = vmatprep.subr.mxu0 0.0
        %461 = vmatpush1.msra.mxu0 0.0
        %462 = vmatprep.subr.mxu0 0.0
        %463 = vmatpush1.msra.mxu0 0.0
        %464 = vmatprep.subr.mxu0 0.0
        %465 = vmatpush1.msra.mxu0 0.0
        %466 = vmatprep.subr.mxu0 0.0
        %467 = vmatpush1.msra.mxu0 0.0
        %468 = vmatprep.subr.mxu0 0.0
        %469 = vmatpush1.msra.mxu0 0.0
        %470 = vmatprep.subr.mxu0 0.0
        %471 = vmatpush1.msra.mxu0 0.0
        %472 = vmatprep.subr.mxu0 0.0
        %473 = vmatpush1.msra.mxu0 0.0
        %474 = vmatprep.subr.mxu0 0.0
        %475 = vmatpush1.msra.mxu0 0.0
        %476 = vmatprep.subr.mxu0 0.0
        %477 = vmatpush1.msra.mxu0 0.0
        %478 = vmatprep.mubr.f32.mxu0 0.0
        %479 = vmatmul.mubr.f32.gmra.mrb[0].mxu0 %v319
        %v480 = vpop.f32.mrb[0].mxu0
        %v481 = vadd.f32 %v251, %v480
        %v482 = vpop.f32.mrb[0].mxu0
        %483 = vmatprep.mubr.f32.mxu0 0.0
        %484 = vmatmul.mubr.f32.gmra.mrb[0].mxu0 %v322
        %v485 = vpop.f32.mrb[0].mxu0
        %v486 = vadd.f32 %v251, %v485
        %v487 = vpop.f32.mrb[0].mxu0
        %488 = vmatprep.mubr.f32.mxu0 0.0
        %489 = vmatmul.mubr.f32.gmra.mrb[0].mxu0 %v325
        %v490 = vpop.f32.mrb[0].mxu0
        %v491 = vadd.f32 %v251, %v490
        %v492 = vpop.f32.mrb[0].mxu0
        %493 = vmatprep.mubr.f32.mxu0 0.0
        %494 = vmatmul.mubr.f32.gmra.mrb[0].mxu0 %v328
        %v495 = vpop.f32.mrb[0].mxu0
        %v496 = vadd.f32 %v251, %v495
        %v497 = vpop.f32.mrb[0].mxu0
        %498 = vmatprep.mubr.f32.mxu0 0.0
        %499 = vmatmul.mubr.f32.gmra.mrb[0].mxu0 %v331
        %v500 = vpop.f32.mrb[0].mxu0
        %v501 = vadd.f32 %v251, %v500
        %v502 = vpop.f32.mrb[0].mxu0
        %503 = vmatprep.mubr.f32.mxu0 0.0
        %504 = vmatmul.mubr.f32.gmra.mrb[0].mxu0 %v334
        %v505 = vpop.f32.mrb[0].mxu0
        %v506 = vadd.f32 %v251, %v505
        %v507 = vpop.f32.mrb[0].mxu0
        %508 = vmatprep.mubr.f32.mxu0 0.0
        %509 = vmatmul.mubr.f32.gmra.mrb[0].mxu0 %v337
        %v510 = vpop.f32.mrb[0].mxu0
        %v511 = vadd.f32 %v251, %v510
        %v512 = vpop.f32.mrb[0].mxu0
        %513 = vmatprep.mubr.f32.mxu0 0.0
        %514 = vmatmul.mubr.f32.gmra.mrb[0].mxu0 %v340
        %v515 = vpop.f32.mrb[0].mxu0
        %v516 = vadd.f32 %v251, %v515
        %v517 = vpop.f32.mrb[0].mxu0
        %518 = vmatprep.mubr.f32.mxu0 0.0
        %519 = vmatmul.mubr.f32.gmra.mrb[0].mxu0 %v343
        %v520 = vpop.f32.mrb[0].mxu0
        %v521 = vadd.f32 %v251, %v520
        %v522 = vpop.f32.mrb[0].mxu0
        %523 = vmatprep.mubr.f32.mxu0 0.0
        %524 = vmatmul.mubr.f32.gmra.mrb[0].mxu0 %v346
        %v525 = vpop.f32.mrb[0].mxu0
        %v526 = vadd.f32 %v251, %v525
        %v527 = vpop.f32.mrb[0].mxu0
        %528 = vmatprep.mubr.f32.mxu0 0.0
        %529 = vmatmul.mubr.f32.gmra.mrb[0].mxu0 %v349
        %v530 = vpop.f32.mrb[0].mxu0
        %v531 = vadd.f32 %v251, %v530
        %v532 = vpop.f32.mrb[0].mxu0
        %533 = vmatprep.mubr.f32.mxu0 0.0
        %534 = vmatmul.mubr.f32.gmra.mrb[0].mxu0 %v352
        %v535 = vpop.f32.mrb[0].mxu0
        %v536 = vadd.f32 %v251, %v535
        %v537 = vpop.f32.mrb[0].mxu0
        %538 = vmatprep.mubr.f32.mxu0 0.0
        %539 = vmatmul.mubr.f32.gmra.mrb[0].mxu0 %v355
        %v540 = vpop.f32.mrb[0].mxu0
        %v541 = vadd.f32 %v251, %v540
        %v542 = vpop.f32.mrb[0].mxu0
        %543 = vmatprep.mubr.f32.mxu0 0.0
        %544 = vmatmul.mubr.f32.gmra.mrb[0].mxu0 %v358
        %v545 = vpop.f32.mrb[0].mxu0
        %v546 = vadd.f32 %v251, %v545
        %v547 = vpop.f32.mrb[0].mxu0
        %548 = vmatprep.mubr.f32.mxu0 0.0
        %549 = vmatmul.mubr.f32.gmra.mrb[0].mxu0 %v361
        %v550 = vpop.f32.mrb[0].mxu0
        %v551 = vadd.f32 %v251, %v550
        %v552 = vpop.f32.mrb[0].mxu0
        %553 = vmatprep.mubr.f32.mxu0 0.0
        %554 = vmatmul.mubr.f32.gmra.mrb[0].mxu0 %v364
        %v555 = vpop.f32.mrb[0].mxu0
        %v556 = vadd.f32 %v251, %v555
        %v557 = vpop.f32.mrb[0].mxu0
        %558 = vmatprep.mubr.f32.mxu0 0.0
        %559 = vmatmul.mubr.f32.gmra.mrb[0].mxu0 %v367
        %v560 = vpop.f32.mrb[0].mxu0
        %v561 = vadd.f32 %v251, %v560
        %v562 = vpop.f32.mrb[0].mxu0
        %563 = vmatprep.mubr.f32.mxu0 0.0
        %564 = vmatmul.mubr.f32.gmra.mrb[0].mxu0 %v370
        %v565 = vpop.f32.mrb[0].mxu0
        %v566 = vadd.f32 %v251, %v565
        %v567 = vpop.f32.mrb[0].mxu0
        %568 = vmatprep.mubr.f32.mxu0 0.0
        %569 = vmatmul.mubr.f32.gmra.mrb[0].mxu0 %v373
        %v570 = vpop.f32.mrb[0].mxu0
        %v571 = vadd.f32 %v251, %v570
        %v572 = vpop.f32.mrb[0].mxu0
        %573 = vmatprep.mubr.f32.mxu0 0.0
        %574 = vmatmul.mubr.f32.gmra.mrb[0].mxu0 %v376
        %v575 = vpop.f32.mrb[0].mxu0
        %v576 = vadd.f32 %v251, %v575
        %v577 = vpop.f32.mrb[0].mxu0
        %578 = vmatprep.mubr.f32.mxu0 0.0
        %579 = vmatmul.mubr.f32.gmra.mrb[0].mxu0 %v379
        %v580 = vpop.f32.mrb[0].mxu0
        %v581 = vadd.f32 %v251, %v580
        %v582 = vpop.f32.mrb[0].mxu0
        %583 = vmatprep.mubr.f32.mxu0 0.0
        %584 = vmatmul.mubr.f32.gmra.mrb[0].mxu0 %v382
        %v585 = vpop.f32.mrb[0].mxu0
        %v586 = vadd.f32 %v251, %v585
        %v587 = vpop.f32.mrb[0].mxu0
        %588 = vmatprep.mubr.f32.mxu0 0.0
        %589 = vmatmul.mubr.f32.gmra.mrb[0].mxu0 %v385
        %v590 = vpop.f32.mrb[0].mxu0
        %v591 = vadd.f32 %v251, %v590
        %v592 = vpop.f32.mrb[0].mxu0
        %593 = vmatprep.mubr.f32.mxu0 0.0
        %594 = vmatmul.mubr.f32.gmra.mrb[0].mxu0 %v388
        %v595 = vpop.f32.mrb[0].mxu0
        %v596 = vadd.f32 %v251, %v595
        %v597 = vpop.f32.mrb[0].mxu0
        %598 = vmatprep.mubr.f32.mxu0 0.0
        %599 = vmatmul.mubr.f32.gmra.mrb[0].mxu0 %v391
        %v600 = vpop.f32.mrb[0].mxu0
        %v601 = vadd.f32 %v251, %v600
        %v602 = vpop.f32.mrb[0].mxu0
        %603 = vmatprep.mubr.f32.mxu0 0.0
        %604 = vmatmul.mubr.f32.gmra.mrb[0].mxu0 %v394
        %v605 = vpop.f32.mrb[0].mxu0
        %v606 = vadd.f32 %v251, %v605
        %v607 = vpop.f32.mrb[0].mxu0
        %608 = vmatprep.mubr.f32.mxu0 0.0
        %609 = vmatmul.mubr.f32.gmra.mrb[0].mxu0 %v397
        %v610 = vpop.f32.mrb[0].mxu0
        %v611 = vadd.f32 %v251, %v610
        %v612 = vpop.f32.mrb[0].mxu0
        %613 = vmatprep.mubr.f32.mxu0 0.0
        %614 = vmatmul.mubr.f32.gmra.mrb[0].mxu0 %v400
        %v615 = vpop.f32.mrb[0].mxu0
        %v616 = vadd.f32 %v251, %v615
        %v617 = vpop.f32.mrb[0].mxu0
        %618 = vmatprep.mubr.f32.mxu0 0.0
        %619 = vmatmul.mubr.f32.gmra.mrb[0].mxu0 %v403
        %v620 = vpop.f32.mrb[0].mxu0
        %v621 = vadd.f32 %v251, %v620
        %v622 = vpop.f32.mrb[0].mxu0
        %623 = vmatprep.mubr.f32.mxu0 0.0
        %624 = vmatmul.mubr.f32.gmra.mrb[0].mxu0 %v406
        %v625 = vpop.f32.mrb[0].mxu0
        %v626 = vadd.f32 %v251, %v625
        %v627 = vpop.f32.mrb[0].mxu0
        %628 = vmatprep.mubr.f32.mxu0 0.0
        %629 = vmatmul.mubr.f32.gmra.mrb[0].mxu0 %v409
        %v630 = vpop.f32.mrb[0].mxu0
        %v631 = vadd.f32 %v251, %v630
        %v632 = vpop.f32.mrb[0].mxu0
        %633 = vmatprep.mubr.f32.mxu0 0.0
        %634 = vmatmul.mubr.f32.gmra.mrb[0].mxu0 %v412
        %v635 = vpop.f32.mrb[0].mxu0
        %v636 = vadd.f32 %v251, %v635
        %v637 = vpop.f32.mrb[0].mxu0
        %638 = vdwg.mxu0
        %vm639 = vcmask 244736
        %640 = vst.msk [vmem:[%s232] sm:$0xff] %vm639, %v481
        %641 = vst.msk [vmem:[%s232 + $0x8] sm:$0xff] %vm639, %v486
        %642 = vst.msk [vmem:[%s232 + $0x10] sm:$0xff] %vm639, %v491
        %643 = vst.msk [vmem:[%s232 + $0x18] sm:$0xff] %vm639, %v496
        %644 = vst.msk [vmem:[%s232 + $0x20] sm:$0xff] %vm639, %v501
        %645 = vst.msk [vmem:[%s232 + $0x28] sm:$0xff] %vm639, %v506
        %646 = vst.msk [vmem:[%s232 + $0x30] sm:$0xff] %vm639, %v511
        %647 = vst.msk [vmem:[%s232 + $0x38] sm:$0xff] %vm639, %v516
        %648 = vst.msk [vmem:[%s232 + $0x40] sm:$0xff] %vm639, %v521
        %649 = vst.msk [vmem:[%s232 + $0x48] sm:$0xff] %vm639, %v526
        %650 = vst.msk [vmem:[%s232 + $0x50] sm:$0xff] %vm639, %v531
        %651 = vst.msk [vmem:[%s232 + $0x58] sm:$0xff] %vm639, %v536
        %652 = vst.msk [vmem:[%s232 + $0x60] sm:$0xff] %vm639, %v541
        %653 = vst.msk [vmem:[%s232 + $0x68] sm:$0xff] %vm639, %v546
        %654 = vst.msk [vmem:[%s232 + $0x70] sm:$0xff] %vm639, %v551
        %655 = vst.msk [vmem:[%s232 + $0x78] sm:$0xff] %vm639, %v556
        %656 = vst.msk [vmem:[%s232 + $0x80] sm:$0xff] %vm639, %v561
        %657 = vst.msk [vmem:[%s232 + $0x88] sm:$0xff] %vm639, %v566
        %658 = vst.msk [vmem:[%s232 + $0x90] sm:$0xff] %vm639, %v571
        %659 = vst.msk [vmem:[%s232 + $0x98] sm:$0xff] %vm639, %v576
        %660 = vst.msk [vmem:[%s232 + $0xa0] sm:$0xff] %vm639, %v581
        %661 = vst.msk [vmem:[%s232 + $0xa8] sm:$0xff] %vm639, %v586
        %662 = vst.msk [vmem:[%s232 + $0xb0] sm:$0xff] %vm639, %v591
        %663 = vst.msk [vmem:[%s232 + $0xb8] sm:$0xff] %vm639, %v596
        %664 = vst.msk [vmem:[%s232 + $0xc0] sm:$0xff] %vm639, %v601
        %665 = vst.msk [vmem:[%s232 + $0xc8] sm:$0xff] %vm639, %v606
        %666 = vst.msk [vmem:[%s232 + $0xd0] sm:$0xff] %vm639, %v611
        %667 = vst.msk [vmem:[%s232 + $0xd8] sm:$0xff] %vm639, %v616
        %668 = vst.msk [vmem:[%s232 + $0xe0] sm:$0xff] %vm639, %v621
        %669 = vst.msk [vmem:[%s232 + $0xe8] sm:$0xff] %vm639, %v626
        %670 = vst.msk [vmem:[%s232 + $0xf0] sm:$0xff] %vm639, %v631
        %671 = vst.msk [vmem:[%s232 + $0xf8] sm:$0xff] %vm639, %v636
        %s672 = smul.u32 32, %s23
        %p673 = scmp.lt.s32.totalorder %s22, 1
        %s674 = scalar_select %p673, %s22, 1
        %p675 = scmp.lt.s32.totalorder %s672, 31
        %s676 = scalar_select %p675, %s672, 31
        %s677 = smul.addr %s674, 32
        %s678 = sadd.s32 %s676, %s677
        %s679 = smul.addr %s678, 8
        %s680 = scalar_lea.vmem %s3, %s679
        // Predicated region
        $region41: #{tpu_custom_call.1} parent=31 // pred_check
          %p681 = pneg %p120
        $region42: #{tpu_custom_call.1} parent=31 // pred_check_branch
          %683 = sbr.rel (%p681) target = $region44
        $region43: #{tpu_custom_call.1} parent=31 // pred_region
          %s684 = smul.u32 32, %s23
        $region44: #{tpu_custom_call.1} parent=31 // pred_fallthru
          _
      $region32: #{tpu_custom_call.1} parent=5 // pred_fallthru
        _
      %p685 = scmp.le.s32.totalorder 2, %s13
      // Predicated region
      $region45: #{tpu_custom_call.1} parent=5 // pred_check
        %p686 = pneg %p685
      $region46: #{tpu_custom_call.1} parent=5 // pred_check_branch
        %688 = sbr.rel (%p686) target = $region48
      $region47: #{tpu_custom_call.1} parent=5 // pred_region
        %s689 = ssub.s32 %s13, 2
        // Predicated region
        $region49: #{tpu_custom_call.1} parent=47 // pred_check
          %p690 = pneg %p126
        $region50: #{tpu_custom_call.1} parent=47 // pred_check_branch
          %692 = sbr.rel (%p690) target = $region52
        $region51: #{tpu_custom_call.1} parent=47 // pred_region
          %s693 = smul.u32 32, %s25
          %p694 = scmp.lt.s32.totalorder %s24, 1
          %s695 = scalar_select %p694, %s24, 1
          %p696 = scmp.lt.s32.totalorder %s693, 31
          %s697 = scalar_select %p696, %s693, 31
          %s698 = smul.addr %s695, 32
          %s699 = sadd.s32 %s697, %s698
          %s700 = smul.addr %s699, 8
          %s701 = scalar_lea.vmem %s3, %s700
        $region52: #{tpu_custom_call.1} parent=47 // pred_fallthru
          _
      $region48: #{tpu_custom_call.1} parent=5 // pred_fallthru
        _
    $region6: #{tpu_custom_call.1} parent=1 // loop_footer
      %s17 = sadd.s32 1, %s13
    $region7: #{tpu_custom_call.1} parent=1 // loop_footer_branch
      %12 = sbr.rel target = $region3
    $region8: #{tpu_custom_call.1} parent=1 // loop_exit
      _
    %702 = vsyncpa [#allocation3], 1
    %s703 = scalar_lea.sflag [#allocation3], 1
    %704 = vsyncpa %s703, 1
    %705 = vsyncpa [#allocation5], 1

</llo_original>
